<compile_context>
chip_gen: v7x
topology: tpu7x:2x2x1
jax: 0.10.0
libtpu: 0.0.40
codegen_flags: <defaults>
</compile_context>

<pallas_src>
import jax
import jax.numpy as jnp
from jax.experimental import pallas as pl
from jax.experimental.pallas import tpu as pltpu

# Layer dims of MLP(binary=False, batch_norm=False): 13 -> 32 -> 16 -> 8 -> 7.
_DIMS = [(13, 32), (32, 16), (16, 8), (8, 7)]
_IN_FEATURES = _DIMS[0][0]
_OUT_FEATURES = _DIMS[-1][1]
_LANE = 128
_MAX_TILE_B = 16384            # ~7 MiB peak VMEM/step -> fits v5e/v6e/v7x.
_SMALL_BATCH_FAST_PATH = 1024  # below this, plain jnp beats kernel overhead.


def mlp_kernel(x_ref,
               w1_ref, b1_ref,
               w2_ref, b2_ref,
               w3_ref, b3_ref,
               w4_ref, b4_ref,
               o_ref):
    """Feature-major fused MLP: x block (13, TILE_B) -> out block (7, TILE_B)."""
    x = x_ref[...]
    # Layer 1: Linear(13, 32) + ReLU
    h = jnp.dot(w1_ref[...], x, preferred_element_type=jnp.float32)
    h = jnp.maximum(h + b1_ref[...], 0.0)
    # Layer 2: Linear(32, 16) + ReLU
    h = jnp.dot(w2_ref[...], h, preferred_element_type=jnp.float32)
    h = jnp.maximum(h + b2_ref[...], 0.0)
    # Layer 3: Linear(16, 8) + ReLU
    h = jnp.dot(w3_ref[...], h, preferred_element_type=jnp.float32)
    h = jnp.maximum(h + b3_ref[...], 0.0)
    # Final: Linear(8, 7)   (binary=False -> no sigmoid)
    h = jnp.dot(w4_ref[...], h, preferred_element_type=jnp.float32)
    o_ref[...] = (h + b4_ref[...]).astype(o_ref.dtype)


def _round_up(n, m):
    return ((n + m - 1) // m) * m


def _choose_tiling(batch):
    """Pick (tile_b, padded_batch): lane-aligned, <= _MAX_TILE_B, and with
    >= 2 grid steps whenever the batch spans more than one lane-group so the
    'parallel' axis can shard across both v7x TensorCores."""
    b_lanes = _round_up(max(batch, 1), _LANE)
    if b_lanes <= _LANE:
        tile_b = _LANE
    else:
        n_steps = max(2, pl.cdiv(b_lanes, _MAX_TILE_B))
        tile_b = _round_up(pl.cdiv(b_lanes, n_steps), _LANE)
    n_steps = pl.cdiv(b_lanes, tile_b)
    return tile_b, n_steps * tile_b


def _resident_spec(arr):
    # Full-array block, VMEM-resident across every batch tile.
    return pl.BlockSpec(arr.shape, lambda i: (0, 0))


def _reference_forward(x_rows, params):
    """Pure-JAX MLP (nn.Linear convention: y = x @ W.T + b). x_rows: (B, 13)."""
    h = x_rows
    for i, (w, b) in enumerate(params):
        h = h @ w.T + b
        if i < len(params) - 1:
            h = jnp.maximum(h, 0.0)
    return h


def mlp_forward(x, params, *, use_kernel=None, feature_major_io=False):
    """Fused MLP forward.

    x: (B, 13) float32 (PyTorch row convention), or (13, B) if
       feature_major_io=True (avoids both wrapper transposes).
    params: list of (W (out, in), b (out,)) in nn.Linear orientation.
    Returns (B, 7), or (7, B) if feature_major_io=True.
    """
    B = x.shape[1] if feature_major_io else x.shape[0]

    if use_kernel is None:
        use_kernel = B >= _SMALL_BATCH_FAST_PATH

    if not use_kernel:
        # Small-batch fast path: skip pad/transpose/kernel overhead entirely.
        x_rows = x.T if feature_major_io else x
        out = _reference_forward(x_rows, params)
        return out.T if feature_major_io else out

    tile_b, b_padded = _choose_tiling(B)

    # Single fused transpose+pad into the lane-dense feature-major layout the
    # kernel wants; pad-only if the caller already supplies (13, B).
    x_fm = x if feature_major_io else x.T
    x_fm = jnp.pad(x_fm, ((0, 0), (0, b_padded - B)))          # (13, b_padded)

    flat_args = [x_fm]
    for w, b in params:
        flat_args.append(w)                                     # (out, in)
        flat_args.append(b.reshape(-1, 1))                      # (out, 1)

    in_specs = [pl.BlockSpec((_IN_FEATURES, tile_b), lambda i: (0, i))]
    in_specs += [_resident_spec(a) for a in flat_args[1:]]

    # Advisory cost estimate based on the *padded* kernel traffic.
    flops = 2 * b_padded * sum(fi * fo for fi, fo in _DIMS)
    bytes_accessed = 4 * b_padded * (_IN_FEATURES + _OUT_FEATURES) \
        + 4 * sum(fi * fo + fo for fi, fo in _DIMS)

    out_fm = pl.pallas_call(
        mlp_kernel,
        out_shape=jax.ShapeDtypeStruct((_OUT_FEATURES, b_padded), jnp.float32),
        grid=(b_padded // tile_b,),
        in_specs=in_specs,
        out_specs=pl.BlockSpec((_OUT_FEATURES, tile_b), lambda i: (0, i)),
        compiler_params=pltpu.CompilerParams(
            dimension_semantics=("parallel",),
            vmem_limit_bytes=32 * 1024 * 1024,
        ),
        cost_estimate=pl.CostEstimate(
            flops=flops, transcendentals=0, bytes_accessed=bytes_accessed),
    )(*flat_args)

    out_fm = out_fm[:, :B]
    return out_fm if feature_major_io else out_fm.T


def init_params(key):
    """PyTorch-style init: U(-1/sqrt(fan_in), 1/sqrt(fan_in)), W is (out, in)."""
    params = []
    for (fan_in, fan_out) in _DIMS:
        key, kw, kb = jax.random.split(key, 3)
        bound = 1.0 / (fan_in ** 0.5)
        w = jax.random.uniform(kw, (fan_out, fan_in), jnp.float32,
                               minval=-bound, maxval=bound)
        b = jax.random.uniform(kb, (fan_out,), jnp.float32,
                               minval=-bound, maxval=bound)
        params.append((w, b))
    return params


if __name__ == "__main__":
    key = jax.random.PRNGKey(0)
    key, kx1, kx2 = jax.random.split(key, 3)
    params = init_params(key)

    # Small-shape test (B=8): force the Pallas kernel path so it is exercised.
    B1 = 8
    x1 = jax.random.normal(kx1, (B1, _IN_FEATURES), dtype=jnp.float32)
    out1 = jax.block_until_ready(mlp_forward(x1, params, use_kernel=True))
    ref1 = _reference_forward(x1, params)
    assert out1.shape == (B1, _OUT_FEATURES)
    assert jnp.allclose(out1, ref1, atol=1e-5, rtol=1e-5)

    # Awkward batch size -> exercises the multi-step grid + padding logic.
    B2 = 300
    x2 = jax.random.normal(kx2, (B2, _IN_FEATURES), dtype=jnp.float32)
    out2 = jax.block_until_ready(mlp_forward(x2, params, use_kernel=True))
    ref2 = _reference_forward(x2, params)
    assert out2.shape == (B2, _OUT_FEATURES)
    assert jnp.allclose(out2, ref2, atol=1e-5, rtol=1e-5)

    print("KERNEL_OK")
</pallas_src>

<mosaic_0001>
module attributes {stable_mosaic.version = 11 : i64} {
  func.func @mlp_kernel(%arg0: i32, %arg1: memref<13x128xf32, #tpu.memory_space<vmem>>, %arg2: memref<32x13xf32, #tpu.memory_space<vmem>>, %arg3: memref<32x1xf32, #tpu.memory_space<vmem>>, %arg4: memref<16x32xf32, #tpu.memory_space<vmem>>, %arg5: memref<16x1xf32, #tpu.memory_space<vmem>>, %arg6: memref<8x16xf32, #tpu.memory_space<vmem>>, %arg7: memref<8x1xf32, #tpu.memory_space<vmem>>, %arg8: memref<7x8xf32, #tpu.memory_space<vmem>>, %arg9: memref<7x1xf32, #tpu.memory_space<vmem>>, %arg10: memref<7x128xf32, #tpu.memory_space<vmem>>) attributes {dimension_semantics = [#tpu.dimension_semantics<parallel>], iteration_bounds = array<i64: 1>, scalar_prefetch = 0 : i64, scratch_operands = 0 : i64, tpu.core_type = #tpu.core_type<tc>, window_params = [{transform_indices = @transform_0, window_bounds = array<i64: 13, 128>}, {pipeline_mode = #tpu.pipeline_mode<synchronous>, transform_indices = @transform_1, window_bounds = array<i64: 32, 13>}, {pipeline_mode = #tpu.pipeline_mode<synchronous>, transform_indices = @transform_2, window_bounds = array<i64: 32, 1>}, {pipeline_mode = #tpu.pipeline_mode<synchronous>, transform_indices = @transform_3, window_bounds = array<i64: 16, 32>}, {pipeline_mode = #tpu.pipeline_mode<synchronous>, transform_indices = @transform_4, window_bounds = array<i64: 16, 1>}, {pipeline_mode = #tpu.pipeline_mode<synchronous>, transform_indices = @transform_5, window_bounds = array<i64: 8, 16>}, {pipeline_mode = #tpu.pipeline_mode<synchronous>, transform_indices = @transform_6, window_bounds = array<i64: 8, 1>}, {pipeline_mode = #tpu.pipeline_mode<synchronous>, transform_indices = @transform_7, window_bounds = array<i64: 7, 8>}, {pipeline_mode = #tpu.pipeline_mode<synchronous>, transform_indices = @transform_8, window_bounds = array<i64: 7, 1>}, {transform_indices = @transform_9, window_bounds = array<i64: 7, 128>}]} {
    %c0 = arith.constant 0 : index
    %c0_0 = arith.constant 0 : index
    %0 = vector.load %arg1[%c0, %c0_0] : memref<13x128xf32, #tpu.memory_space<vmem>>, vector<13x128xf32>
    %c0_1 = arith.constant 0 : index
    %c0_2 = arith.constant 0 : index
    %1 = vector.load %arg2[%c0_1, %c0_2] : memref<32x13xf32, #tpu.memory_space<vmem>>, vector<32x13xf32>
    %cst = arith.constant dense<0.000000e+00> : vector<32x128xf32>
    %2 = tpu.matmul %1, %0, %cst {dimension_numbers = #tpu.dot_dimension_numbers<[1], [0], [0], [1], [0, 0, 1, 1], [], []>} : vector<32x13xf32>, vector<13x128xf32>, vector<32x128xf32> -> vector<32x128xf32>
    %c0_3 = arith.constant 0 : index
    %c0_4 = arith.constant 0 : index
    %3 = vector.load %arg3[%c0_3, %c0_4] : memref<32x1xf32, #tpu.memory_space<vmem>>, vector<32x1xf32>
    %4 = vector.broadcast %3 : vector<32x1xf32> to vector<32x128xf32>
    %5 = arith.addf %2, %4 : vector<32x128xf32>
    %cst_5 = arith.constant 0.000000e+00 : f32
    %6 = vector.broadcast %cst_5 : f32 to vector<32x128xf32>
    %7 = arith.maximumf %5, %6 : vector<32x128xf32>
    %c0_6 = arith.constant 0 : index
    %c0_7 = arith.constant 0 : index
    %8 = vector.load %arg4[%c0_6, %c0_7] : memref<16x32xf32, #tpu.memory_space<vmem>>, vector<16x32xf32>
    %cst_8 = arith.constant dense<0.000000e+00> : vector<16x128xf32>
    %9 = tpu.matmul %8, %7, %cst_8 {dimension_numbers = #tpu.dot_dimension_numbers<[1], [0], [0], [1], [0, 0, 1, 1], [], []>} : vector<16x32xf32>, vector<32x128xf32>, vector<16x128xf32> -> vector<16x128xf32>
    %c0_9 = arith.constant 0 : index
    %c0_10 = arith.constant 0 : index
    %10 = vector.load %arg5[%c0_9, %c0_10] : memref<16x1xf32, #tpu.memory_space<vmem>>, vector<16x1xf32>
    %11 = vector.broadcast %10 : vector<16x1xf32> to vector<16x128xf32>
    %12 = arith.addf %9, %11 : vector<16x128xf32>
    %cst_11 = arith.constant 0.000000e+00 : f32
    %13 = vector.broadcast %cst_11 : f32 to vector<16x128xf32>
    %14 = arith.maximumf %12, %13 : vector<16x128xf32>
    %c0_12 = arith.constant 0 : index
    %c0_13 = arith.constant 0 : index
    %15 = vector.load %arg6[%c0_12, %c0_13] : memref<8x16xf32, #tpu.memory_space<vmem>>, vector<8x16xf32>
    %cst_14 = arith.constant dense<0.000000e+00> : vector<8x128xf32>
    %16 = tpu.matmul %15, %14, %cst_14 {dimension_numbers = #tpu.dot_dimension_numbers<[1], [0], [0], [1], [0, 0, 1, 1], [], []>} : vector<8x16xf32>, vector<16x128xf32>, vector<8x128xf32> -> vector<8x128xf32>
    %c0_15 = arith.constant 0 : index
    %c0_16 = arith.constant 0 : index
    %17 = vector.load %arg7[%c0_15, %c0_16] : memref<8x1xf32, #tpu.memory_space<vmem>>, vector<8x1xf32>
    %18 = vector.broadcast %17 : vector<8x1xf32> to vector<8x128xf32>
    %19 = arith.addf %16, %18 : vector<8x128xf32>
    %cst_17 = arith.constant 0.000000e+00 : f32
    %20 = vector.broadcast %cst_17 : f32 to vector<8x128xf32>
    %21 = arith.maximumf %19, %20 : vector<8x128xf32>
    %c0_18 = arith.constant 0 : index
    %c0_19 = arith.constant 0 : index
    %22 = vector.load %arg8[%c0_18, %c0_19] : memref<7x8xf32, #tpu.memory_space<vmem>>, vector<7x8xf32>
    %cst_20 = arith.constant dense<0.000000e+00> : vector<7x128xf32>
    %23 = tpu.matmul %22, %21, %cst_20 {dimension_numbers = #tpu.dot_dimension_numbers<[1], [0], [0], [1], [0, 0, 1, 1], [], []>} : vector<7x8xf32>, vector<8x128xf32>, vector<7x128xf32> -> vector<7x128xf32>
    %c0_21 = arith.constant 0 : index
    %c0_22 = arith.constant 0 : index
    %24 = vector.load %arg9[%c0_21, %c0_22] : memref<7x1xf32, #tpu.memory_space<vmem>>, vector<7x1xf32>
    %25 = vector.broadcast %24 : vector<7x1xf32> to vector<7x128xf32>
    %26 = arith.addf %23, %25 : vector<7x128xf32>
    %c0_23 = arith.constant 0 : index
    %c0_24 = arith.constant 0 : index
    %27 = vector.load %arg10[%c0_23, %c0_24] : memref<7x128xf32, #tpu.memory_space<vmem>>, vector<7x128xf32>
    tpu.vector_store %arg10[%c0_23, %c0_24], %26 {strides = array<i32>} : memref<7x128xf32, #tpu.memory_space<vmem>>, vector<7x128xf32>,
    return
  }
  func.func @transform_0(%arg0: i32) -> (i32, i32) {
    %c0_i32 = arith.constant 0 : i32
    %c0_i32_0 = arith.constant 0 : i32
    return %c0_i32, %arg0 : i32, i32
  }
  func.func @transform_1(%arg0: i32) -> (i32, i32) {
    %c0_i32 = arith.constant 0 : i32
    %c0_i32_0 = arith.constant 0 : i32
    %c0_i32_1 = arith.constant 0 : i32
    return %c0_i32, %c0_i32_0 : i32, i32
  }
  func.func @transform_2(%arg0: i32) -> (i32, i32) {
    %c0_i32 = arith.constant 0 : i32
    %c0_i32_0 = arith.constant 0 : i32
    %c0_i32_1 = arith.constant 0 : i32
    return %c0_i32, %c0_i32_0 : i32, i32
  }
  func.func @transform_3(%arg0: i32) -> (i32, i32) {
    %c0_i32 = arith.constant 0 : i32
    %c0_i32_0 = arith.constant 0 : i32
    %c0_i32_1 = arith.constant 0 : i32
    return %c0_i32, %c0_i32_0 : i32, i32
  }
  func.func @transform_4(%arg0: i32) -> (i32, i32) {
    %c0_i32 = arith.constant 0 : i32
    %c0_i32_0 = arith.constant 0 : i32
    %c0_i32_1 = arith.constant 0 : i32
    return %c0_i32, %c0_i32_0 : i32, i32
  }
  func.func @transform_5(%arg0: i32) -> (i32, i32) {
    %c0_i32 = arith.constant 0 : i32
    %c0_i32_0 = arith.constant 0 : i32
    %c0_i32_1 = arith.constant 0 : i32
    return %c0_i32, %c0_i32_0 : i32, i32
  }
  func.func @transform_6(%arg0: i32) -> (i32, i32) {
    %c0_i32 = arith.constant 0 : i32
    %c0_i32_0 = arith.constant 0 : i32
    %c0_i32_1 = arith.constant 0 : i32
    return %c0_i32, %c0_i32_0 : i32, i32
  }
  func.func @transform_7(%arg0: i32) -> (i32, i32) {
    %c0_i32 = arith.constant 0 : i32
    %c0_i32_0 = arith.constant 0 : i32
    %c0_i32_1 = arith.constant 0 : i32
    return %c0_i32, %c0_i32_0 : i32, i32
  }
  func.func @transform_8(%arg0: i32) -> (i32, i32) {
    %c0_i32 = arith.constant 0 : i32
    %c0_i32_0 = arith.constant 0 : i32
    %c0_i32_1 = arith.constant 0 : i32
    return %c0_i32, %c0_i32_0 : i32, i32
  }
  func.func @transform_9(%arg0: i32) -> (i32, i32) {
    %c0_i32 = arith.constant 0 : i32
    %c0_i32_0 = arith.constant 0 : i32
    return %c0_i32, %arg0 : i32, i32
  }
}

</mosaic_0001>

<llo_original>
// kernel: tpu_custom_call.1
$region0: #{tpu_custom_call.1}
  #allocation0 [shape = 'u32[]', space=smem, size = 0x4, offset = 0x4, fixed_abs, tag = 'smem constant byte address 0x4 - core index']
  #allocation1 [shape = 'u32[144,128]{1,0:T(1,128)}', space=vmem, size = 0x12000, scoped, tag = 'internal scratch']
  %s0 = inlined_call_operand.vmem [shape: f32[13,128], index: 0, kind: input, shape index: {}]
  %s1 = inlined_call_operand.vmem [shape: f32[32,13], index: 1, kind: input, shape index: {}]
  %s2 = inlined_call_operand.vmem [shape: f32[32,1], index: 2, kind: input, shape index: {}]
  %s3 = inlined_call_operand.vmem [shape: f32[16,32], index: 3, kind: input, shape index: {}]
  %s4 = inlined_call_operand.vmem [shape: f32[16,1], index: 4, kind: input, shape index: {}]
  %s5 = inlined_call_operand.vmem [shape: f32[8,16], index: 5, kind: input, shape index: {}]
  %s6 = inlined_call_operand.vmem [shape: f32[8,1], index: 6, kind: input, shape index: {}]
  %s7 = inlined_call_operand.vmem [shape: f32[7,8], index: 7, kind: input, shape index: {}]
  %s8 = inlined_call_operand.vmem [shape: f32[7,1], index: 8, kind: input, shape index: {}]
  %s9 = inlined_call_operand.hbm [shape: f32[7,128], index: 9, kind: output, shape index: {}]
  %s10 = sld [smem:[#allocation0]]
  $region46: #{tpu_custom_call.1} parent=0
    _
  %s12 = ssub.s32 1, %s10
  %s13 = scalar_select 0, %s12, %s10
  $region1: #{tpu_custom_call.1} parent=0
    #allocation2 [shape = 'u8[4096]{0}', space=vmem, size = 0x1000, scoped, tag = 'output window, operand 0, single buffered']
    #allocation3 [shape = 's32[1]{0}', space=sflag, size = 0x4, scoped, tag = 'scoped memory for tpu_custom_call.1']
    %14 = vsyncpa [#allocation3], 0
    // Predicated region
    $region2: #{tpu_custom_call.1} parent=1 // pred_check
      _
    $region3: #{tpu_custom_call.1} parent=1 // pred_check_branch
      %16 = sbr.rel (0) target = $region5
    $region4: #{tpu_custom_call.1} parent=1 // pred_region
      _
    $region5: #{tpu_custom_call.1} parent=1 // pred_fallthru
      _
    // Predicated region
    $region6: #{tpu_custom_call.1} parent=1 // pred_check
      _
    $region7: #{tpu_custom_call.1} parent=1 // pred_check_branch
      %18 = sbr.rel (0) target = $region9
    $region8: #{tpu_custom_call.1} parent=1 // pred_region
      _
    $region9: #{tpu_custom_call.1} parent=1 // pred_fallthru
      _
    // Predicated region
    $region10: #{tpu_custom_call.1} parent=1 // pred_check
      _
    $region11: #{tpu_custom_call.1} parent=1 // pred_check_branch
      %20 = sbr.rel (0) target = $region13
    $region12: #{tpu_custom_call.1} parent=1 // pred_region
      _
    $region13: #{tpu_custom_call.1} parent=1 // pred_fallthru
      _
    // Predicated region
    $region14: #{tpu_custom_call.1} parent=1 // pred_check
      _
    $region15: #{tpu_custom_call.1} parent=1 // pred_check_branch
      %22 = sbr.rel (0) target = $region17
    $region16: #{tpu_custom_call.1} parent=1 // pred_region
      _
    $region17: #{tpu_custom_call.1} parent=1 // pred_fallthru
      _
    // Predicated region
    $region18: #{tpu_custom_call.1} parent=1 // pred_check
      _
    $region19: #{tpu_custom_call.1} parent=1 // pred_check_branch
      %24 = sbr.rel (0) target = $region21
    $region20: #{tpu_custom_call.1} parent=1 // pred_region
      _
    $region21: #{tpu_custom_call.1} parent=1 // pred_fallthru
      _
    // Predicated region
    $region22: #{tpu_custom_call.1} parent=1 // pred_check
      _
    $region23: #{tpu_custom_call.1} parent=1 // pred_check_branch
      %26 = sbr.rel (0) target = $region25
    $region24: #{tpu_custom_call.1} parent=1 // pred_region
      _
    $region25: #{tpu_custom_call.1} parent=1 // pred_fallthru
      _
    // Predicated region
    $region26: #{tpu_custom_call.1} parent=1 // pred_check
      _
    $region27: #{tpu_custom_call.1} parent=1 // pred_check_branch
      %28 = sbr.rel (0) target = $region29
    $region28: #{tpu_custom_call.1} parent=1 // pred_region
      _
    $region29: #{tpu_custom_call.1} parent=1 // pred_fallthru
      _
    // Predicated region
    $region30: #{tpu_custom_call.1} parent=1 // pred_check
      _
    $region31: #{tpu_custom_call.1} parent=1 // pred_check_branch
      %30 = sbr.rel (0) target = $region33
    $region32: #{tpu_custom_call.1} parent=1 // pred_region
      _
    $region33: #{tpu_custom_call.1} parent=1 // pred_fallthru
      _
    // Predicated region
    $region34: #{tpu_custom_call.1} parent=1 // pred_check
      _
    $region35: #{tpu_custom_call.1} parent=1 // pred_check_branch
      %32 = sbr.rel (0) target = $region37
    $region36: #{tpu_custom_call.1} parent=1 // pred_region
      _
    $region37: #{tpu_custom_call.1} parent=1 // pred_fallthru
      _
    %v33 = vld [vmem:[%s0] sm:$0xff]
    %v34 = vld [vmem:[%s0 + $0x8] sm:$0x1f]
    %v35 = vld [vmem:[%s1] sm:$0xff]
    %v36 = vld [vmem:[%s1 + $0x8] sm:$0xff]
    %v37 = vld [vmem:[%s1 + $0x10] sm:$0xff]
    %v38 = vld [vmem:[%s1 + $0x18] sm:$0xff]
    %v39 = vld [vmem:[%s2] sm:$0xff]
    %v40 = vld [vmem:[%s2 + $0x8] sm:$0xff]
    %v41 = vld [vmem:[%s2 + $0x10] sm:$0xff]
    %v42 = vld [vmem:[%s2 + $0x18] sm:$0xff]
    %44 = vset.pattern.permute.xlu0 0
    %45 = vperm.xlu0 %44, %v39
    %v46 = vpop.permute.xlu0 %45
    %49 = vset.pattern.permute.xlu0 0
    %50 = vperm.xlu0 %49, %v40
    %v51 = vpop.permute.xlu0 %50
    %54 = vset.pattern.permute.xlu0 0
    %55 = vperm.xlu0 %54, %v41
    %v56 = vpop.permute.xlu0 %55
    %59 = vset.pattern.permute.xlu0 0
    %60 = vperm.xlu0 %59, %v42
    %v61 = vpop.permute.xlu0 %60
    %vm63 = vcmask 105472
    %v65 = vsel %vm63, %v35, 0
    %v68 = vsel %vm63, %v36, 0
    %v71 = vsel %vm63, %v37, 0
    %v74 = vsel %vm63, %v38, 0
    %vm76 = vcmask 1044480
    %v78 = vsel %vm76, %v34, 0
    %80 = vmatprep.subr.mxu0 0.0
    %81 = vmatpush1.msra.mxu0 %v33
    %82 = vmatprep.subr.mxu0 0.0
    %83 = vmatpush1.msra.mxu0 %v78
    %84 = vmatprep.subr.mxu0 0.0
    %85 = vmatpush1.msra.mxu0 0.0
    %86 = vmatprep.subr.mxu0 0.0
    %87 = vmatpush1.msra.mxu0 0.0
    %88 = vmatprep.subr.mxu0 0.0
    %89 = vmatpush1.msra.mxu0 0.0
    %90 = vmatprep.subr.mxu0 0.0
    %91 = vmatpush1.msra.mxu0 0.0
    %92 = vmatprep.subr.mxu0 0.0
    %93 = vmatpush1.msra.mxu0 0.0
    %94 = vmatprep.subr.mxu0 0.0
    %95 = vmatpush1.msra.mxu0 0.0
    %96 = vmatprep.subr.mxu0 0.0
    %97 = vmatpush1.msra.mxu0 0.0
    %98 = vmatprep.subr.mxu0 0.0
    %99 = vmatpush1.msra.mxu0 0.0
    %100 = vmatprep.subr.mxu0 0.0
    %101 = vmatpush1.msra.mxu0 0.0
    %102 = vmatprep.subr.mxu0 0.0
    %103 = vmatpush1.msra.mxu0 0.0
    %104 = vmatprep.subr.mxu0 0.0
    %105 = vmatpush1.msra.mxu0 0.0
    %106 = vmatprep.subr.mxu0 0.0
    %107 = vmatpush1.msra.mxu0 0.0
    %108 = vmatprep.subr.mxu0 0.0
    %109 = vmatpush1.msra.mxu0 0.0
    %110 = vmatprep.subr.mxu0 0.0
    %111 = vmatpush1.msra.mxu0 0.0
    %112 = vmatprep.subr.mxu0 0.0
    %113 = vmatpush1.msra.mxu0 0.0
    %114 = vmatprep.subr.mxu0 0.0
    %115 = vmatpush1.msra.mxu0 0.0
    %116 = vmatprep.subr.mxu0 0.0
    %117 = vmatpush1.msra.mxu0 0.0
    %118 = vmatprep.subr.mxu0 0.0
    %119 = vmatpush1.msra.mxu0 0.0
    %120 = vmatprep.subr.mxu0 0.0
    %121 = vmatpush1.msra.mxu0 0.0
    %122 = vmatprep.subr.mxu0 0.0
    %123 = vmatpush1.msra.mxu0 0.0
    %124 = vmatprep.subr.mxu0 0.0
    %125 = vmatpush1.msra.mxu0 0.0
    %126 = vmatprep.subr.mxu0 0.0
    %127 = vmatpush1.msra.mxu0 0.0
    %128 = vmatprep.subr.mxu0 0.0
    %129 = vmatpush1.msra.mxu0 0.0
    %130 = vmatprep.subr.mxu0 0.0
    %131 = vmatpush1.msra.mxu0 0.0
    %132 = vmatprep.subr.mxu0 0.0
    %133 = vmatpush1.msra.mxu0 0.0
    %134 = vmatprep.subr.mxu0 0.0
    %135 = vmatpush1.msra.mxu0 0.0
    %136 = vmatprep.subr.mxu0 0.0
    %137 = vmatpush1.msra.mxu0 0.0
    %138 = vmatprep.subr.mxu0 0.0
    %139 = vmatpush1.msra.mxu0 0.0
    %140 = vmatprep.subr.mxu0 0.0
    %141 = vmatpush1.msra.mxu0 0.0
    %142 = vmatprep.subr.mxu0 0.0
    %143 = vmatpush1.msra.mxu0 0.0
    %144 = vmatprep.mubr.f32.mxu0 0.0
    %145 = vmatmul.mubr.f32.gmra.mrb[0].mxu0 %v65
    %v146 = vpop.f32.mrb[0].mxu0
    %v147 = vadd.f32 %v46, %v146
    %v148 = vpop.f32.mrb[0].mxu0
    %149 = vmatprep.mubr.f32.mxu0 0.0
    %150 = vmatmul.mubr.f32.gmra.mrb[0].mxu0 %v68
    %v151 = vpop.f32.mrb[0].mxu0
    %v152 = vadd.f32 %v51, %v151
    %v153 = vpop.f32.mrb[0].mxu0
    %154 = vmatprep.mubr.f32.mxu0 0.0
    %155 = vmatmul.mubr.f32.gmra.mrb[0].mxu0 %v71
    %v156 = vpop.f32.mrb[0].mxu0
    %v157 = vadd.f32 %v56, %v156
    %v158 = vpop.f32.mrb[0].mxu0
    %159 = vmatprep.mubr.f32.mxu0 0.0
    %160 = vmatmul.mubr.f32.gmra.mrb[0].mxu0 %v74
    %v161 = vpop.f32.mrb[0].mxu0
    %v162 = vadd.f32 %v61, %v161
    %v163 = vpop.f32.mrb[0].mxu0
    %164 = vdwg.mxu0
    %v165 = vmax.f32 %v147, 0.0
    %v166 = vmax.f32 %v152, 0.0
    %v167 = vmax.f32 %v157, 0.0
    %v168 = vmax.f32 %v162, 0.0
    %v169 = vld [vmem:[%s3] sm:$0xff]
    %v170 = vld [vmem:[%s3 + $0x8] sm:$0xff]
    %v171 = vld [vmem:[%s4] sm:$0xff]
    %v172 = vld [vmem:[%s4 + $0x8] sm:$0xff]
    %174 = vset.pattern.permute.xlu0 0
    %175 = vperm.xlu0 %174, %v171
    %v176 = vpop.permute.xlu0 %175
    %179 = vset.pattern.permute.xlu0 0
    %180 = vperm.xlu0 %179, %v172
    %v181 = vpop.permute.xlu0 %180
    %vm183 = vcmask 261120
    %v185 = vsel %vm183, %v169, 0
    %v188 = vsel %vm183, %v170, 0
    %190 = vmatprep.subr.mxu0 0.0
    %191 = vmatpush1.msra.mxu0 %v165
    %192 = vmatprep.subr.mxu0 0.0
    %193 = vmatpush1.msra.mxu0 %v166
    %194 = vmatprep.subr.mxu0 0.0
    %195 = vmatpush1.msra.mxu0 %v167
    %196 = vmatprep.subr.mxu0 0.0
    %197 = vmatpush1.msra.mxu0 %v168
    %198 = vmatprep.subr.mxu0 0.0
    %199 = vmatpush1.msra.mxu0 0.0
    %200 = vmatprep.subr.mxu0 0.0
    %201 = vmatpush1.msra.mxu0 0.0
    %202 = vmatprep.subr.mxu0 0.0
    %203 = vmatpush1.msra.mxu0 0.0
    %204 = vmatprep.subr.mxu0 0.0
    %205 = vmatpush1.msra.mxu0 0.0
    %206 = vmatprep.subr.mxu0 0.0
    %207 = vmatpush1.msra.mxu0 0.0
    %208 = vmatprep.subr.mxu0 0.0
    %209 = vmatpush1.msra.mxu0 0.0
    %210 = vmatprep.subr.mxu0 0.0
    %211 = vmatpush1.msra.mxu0 0.0
    %212 = vmatprep.subr.mxu0 0.0
    %213 = vmatpush1.msra.mxu0 0.0
    %214 = vmatprep.subr.mxu0 0.0
    %215 = vmatpush1.msra.mxu0 0.0
    %216 = vmatprep.subr.mxu0 0.0
    %217 = vmatpush1.msra.mxu0 0.0
    %218 = vmatprep.subr.mxu0 0.0
    %219 = vmatpush1.msra.mxu0 0.0
    %220 = vmatprep.subr.mxu0 0.0
    %221 = vmatpush1.msra.mxu0 0.0
    %222 = vmatprep.subr.mxu0 0.0
    %223 = vmatpush1.msra.mxu0 0.0
    %224 = vmatprep.subr.mxu0 0.0
    %225 = vmatpush1.msra.mxu0 0.0
    %226 = vmatprep.subr.mxu0 0.0
    %227 = vmatpush1.msra.mxu0 0.0
    %228 = vmatprep.subr.mxu0 0.0
    %229 = vmatpush1.msra.mxu0 0.0
    %230 = vmatprep.subr.mxu0 0.0
    %231 = vmatpush1.msra.mxu0 0.0
    %232 = vmatprep.subr.mxu0 0.0
    %233 = vmatpush1.msra.mxu0 0.0
    %234 = vmatprep.subr.mxu0 0.0
    %235 = vmatpush1.msra.mxu0 0.0
    %236 = vmatprep.subr.mxu0 0.0
    %237 = vmatpush1.msra.mxu0 0.0
    %238 = vmatprep.subr.mxu0 0.0
    %239 = vmatpush1.msra.mxu0 0.0
    %240 = vmatprep.subr.mxu0 0.0
    %241 = vmatpush1.msra.mxu0 0.0
    %242 = vmatprep.subr.mxu0 0.0
    %243 = vmatpush1.msra.mxu0 0.0
    %244 = vmatprep.subr.mxu0 0.0
    %245 = vmatpush1.msra.mxu0 0.0
    %246 = vmatprep.subr.mxu0 0.0
    %247 = vmatpush1.msra.mxu0 0.0
    %248 = vmatprep.subr.mxu0 0.0
    %249 = vmatpush1.msra.mxu0 0.0
    %250 = vmatprep.subr.mxu0 0.0
    %251 = vmatpush1.msra.mxu0 0.0
    %252 = vmatprep.subr.mxu0 0.0
    %253 = vmatpush1.msra.mxu0 0.0
    %254 = vmatprep.mubr.f32.mxu0 0.0
    %255 = vmatmul.mubr.f32.gmra.mrb[0].mxu0 %v185
    %v256 = vpop.f32.mrb[0].mxu0
    %v257 = vadd.f32 %v176, %v256
    %v258 = vpop.f32.mrb[0].mxu0
    %259 = vmatprep.mubr.f32.mxu0 0.0
    %260 = vmatmul.mubr.f32.gmra.mrb[0].mxu0 %v188
    %v261 = vpop.f32.mrb[0].mxu0
    %v262 = vadd.f32 %v181, %v261
    %v263 = vpop.f32.mrb[0].mxu0
    %264 = vdwg.mxu0
    %v265 = vmax.f32 %v257, 0.0
    %v266 = vmax.f32 %v262, 0.0
    %v267 = vld [vmem:[%s5] sm:$0xff]
    %v268 = vld [vmem:[%s6] sm:$0xff]
    %270 = vset.pattern.permute.xlu0 0
    %271 = vperm.xlu0 %270, %v268
    %v272 = vpop.permute.xlu0 %271
    %vm274 = vcmask 130048
    %v276 = vsel %vm274, %v267, 0
    %278 = vmatprep.subr.mxu0 0.0
    %279 = vmatpush1.msra.mxu0 %v265
    %280 = vmatprep.subr.mxu0 0.0
    %281 = vmatpush1.msra.mxu0 %v266
    %282 = vmatprep.subr.mxu0 0.0
    %283 = vmatpush1.msra.mxu0 0.0
    %284 = vmatprep.subr.mxu0 0.0
    %285 = vmatpush1.msra.mxu0 0.0
    %286 = vmatprep.subr.mxu0 0.0
    %287 = vmatpush1.msra.mxu0 0.0
    %288 = vmatprep.subr.mxu0 0.0
    %289 = vmatpush1.msra.mxu0 0.0
    %290 = vmatprep.subr.mxu0 0.0
    %291 = vmatpush1.msra.mxu0 0.0
    %292 = vmatprep.subr.mxu0 0.0
    %293 = vmatpush1.msra.mxu0 0.0
    %294 = vmatprep.subr.mxu0 0.0
    %295 = vmatpush1.msra.mxu0 0.0
    %296 = vmatprep.subr.mxu0 0.0
    %297 = vmatpush1.msra.mxu0 0.0
    %298 = vmatprep.subr.mxu0 0.0
    %299 = vmatpush1.msra.mxu0 0.0
    %300 = vmatprep.subr.mxu0 0.0
    %301 = vmatpush1.msra.mxu0 0.0
    %302 = vmatprep.subr.mxu0 0.0
    %303 = vmatpush1.msra.mxu0 0.0
    %304 = vmatprep.subr.mxu0 0.0
    %305 = vmatpush1.msra.mxu0 0.0
    %306 = vmatprep.subr.mxu0 0.0
    %307 = vmatpush1.msra.mxu0 0.0
    %308 = vmatprep.subr.mxu0 0.0
    %309 = vmatpush1.msra.mxu0 0.0
    %310 = vmatprep.subr.mxu0 0.0
    %311 = vmatpush1.msra.mxu0 0.0
    %312 = vmatprep.subr.mxu0 0.0
    %313 = vmatpush1.msra.mxu0 0.0
    %314 = vmatprep.subr.mxu0 0.0
    %315 = vmatpush1.msra.mxu0 0.0
    %316 = vmatprep.subr.mxu0 0.0
    %317 = vmatpush1.msra.mxu0 0.0
    %318 = vmatprep.subr.mxu0 0.0
    %319 = vmatpush1.msra.mxu0 0.0
    %320 = vmatprep.subr.mxu0 0.0
    %321 = vmatpush1.msra.mxu0 0.0
    %322 = vmatprep.subr.mxu0 0.0
    %323 = vmatpush1.msra.mxu0 0.0
    %324 = vmatprep.subr.mxu0 0.0
    %325 = vmatpush1.msra.mxu0 0.0
    %326 = vmatprep.subr.mxu0 0.0
    %327 = vmatpush1.msra.mxu0 0.0
    %328 = vmatprep.subr.mxu0 0.0
    %329 = vmatpush1.msra.mxu0 0.0
    %330 = vmatprep.subr.mxu0 0.0
    %331 = vmatpush1.msra.mxu0 0.0
    %332 = vmatprep.subr.mxu0 0.0
    %333 = vmatpush1.msra.mxu0 0.0
    %334 = vmatprep.subr.mxu0 0.0
    %335 = vmatpush1.msra.mxu0 0.0
    %336 = vmatprep.subr.mxu0 0.0
    %337 = vmatpush1.msra.mxu0 0.0
    %338 = vmatprep.subr.mxu0 0.0
    %339 = vmatpush1.msra.mxu0 0.0
    %340 = vmatprep.subr.mxu0 0.0
    %341 = vmatpush1.msra.mxu0 0.0
    %342 = vmatprep.mubr.f32.mxu0 0.0
    %343 = vmatmul.mubr.f32.gmra.mrb[0].mxu0 %v276
    %v344 = vpop.f32.mrb[0].mxu0
    %v345 = vadd.f32 %v272, %v344
    %v346 = vpop.f32.mrb[0].mxu0
    %347 = vdwg.mxu0
    %v348 = vmax.f32 %v345, 0.0
    %v349 = vld [vmem:[%s7] sm:$0x7f]
    %v350 = vld [vmem:[%s8] sm:$0x7f]
    %352 = vset.pattern.permute.xlu0 0
    %353 = vperm.xlu0 %352, %v350
    %v354 = vpop.permute.xlu0 %353
    %vm356 = vcmask 64512
    %v358 = vsel %vm356, %v349, 0
    %360 = vmatprep.subr.mxu0 0.0
    %361 = vmatpush1.msra.mxu0 %v348
    %362 = vmatprep.subr.mxu0 0.0
    %363 = vmatpush1.msra.mxu0 0.0
    %364 = vmatprep.subr.mxu0 0.0
    %365 = vmatpush1.msra.mxu0 0.0
    %366 = vmatprep.subr.mxu0 0.0
    %367 = vmatpush1.msra.mxu0 0.0
    %368 = vmatprep.subr.mxu0 0.0
    %369 = vmatpush1.msra.mxu0 0.0
    %370 = vmatprep.subr.mxu0 0.0
    %371 = vmatpush1.msra.mxu0 0.0
    %372 = vmatprep.subr.mxu0 0.0
    %373 = vmatpush1.msra.mxu0 0.0
    %374 = vmatprep.subr.mxu0 0.0
    %375 = vmatpush1.msra.mxu0 0.0
    %376 = vmatprep.subr.mxu0 0.0
    %377 = vmatpush1.msra.mxu0 0.0
    %378 = vmatprep.subr.mxu0 0.0
    %379 = vmatpush1.msra.mxu0 0.0
    %380 = vmatprep.subr.mxu0 0.0
    %381 = vmatpush1.msra.mxu0 0.0
    %382 = vmatprep.subr.mxu0 0.0
    %383 = vmatpush1.msra.mxu0 0.0
    %384 = vmatprep.subr.mxu0 0.0
    %385 = vmatpush1.msra.mxu0 0.0
    %386 = vmatprep.subr.mxu0 0.0
    %387 = vmatpush1.msra.mxu0 0.0
    %388 = vmatprep.subr.mxu0 0.0
    %389 = vmatpush1.msra.mxu0 0.0
    %390 = vmatprep.subr.mxu0 0.0
    %391 = vmatpush1.msra.mxu0 0.0
    %392 = vmatprep.subr.mxu0 0.0
    %393 = vmatpush1.msra.mxu0 0.0
    %394 = vmatprep.subr.mxu0 0.0
    %395 = vmatpush1.msra.mxu0 0.0
    %396 = vmatprep.subr.mxu0 0.0
    %397 = vmatpush1.msra.mxu0 0.0
    %398 = vmatprep.subr.mxu0 0.0
    %399 = vmatpush1.msra.mxu0 0.0
    %400 = vmatprep.subr.mxu0 0.0
    %401 = vmatpush1.msra.mxu0 0.0
    %402 = vmatprep.subr.mxu0 0.0
    %403 = vmatpush1.msra.mxu0 0.0
    %404 = vmatprep.subr.mxu0 0.0
    %405 = vmatpush1.msra.mxu0 0.0
    %406 = vmatprep.subr.mxu0 0.0
    %407 = vmatpush1.msra.mxu0 0.0
    %408 = vmatprep.subr.mxu0 0.0
    %409 = vmatpush1.msra.mxu0 0.0
    %410 = vmatprep.subr.mxu0 0.0
    %411 = vmatpush1.msra.mxu0 0.0
    %412 = vmatprep.subr.mxu0 0.0
    %413 = vmatpush1.msra.mxu0 0.0
    %414 = vmatprep.subr.mxu0 0.0
    %415 = vmatpush1.msra.mxu0 0.0
    %416 = vmatprep.subr.mxu0 0.0
    %417 = vmatpush1.msra.mxu0 0.0
    %418 = vmatprep.subr.mxu0 0.0
    %419 = vmatpush1.msra.mxu0 0.0
    %420 = vmatprep.subr.mxu0 0.0
    %421 = vmatpush1.msra.mxu0 0.0
    %422 = vmatprep.subr.mxu0 0.0
    %423 = vmatpush1.msra.mxu0 0.0
    %424 = vmatprep.mubr.f32.mxu0 0.0
    %425 = vmatmul.mubr.f32.gmra.mrb[0].mxu0 %v358
    %v426 = vpop.f32.mrb[0].mxu0
    %v427 = vadd.f32 %v354, %v426
    %v428 = vpop.f32.mrb[0].mxu0
    %429 = vdwg.mxu0
    %430 = vst [vmem:[#allocation2] sm:$0x7f] %v427
    // Predicated region
    $region38: #{tpu_custom_call.1} parent=1 // pred_check
      _
    $region39: #{tpu_custom_call.1} parent=1 // pred_check_branch
      %432 = sbr.rel (0) target = $region41
    $region40: #{tpu_custom_call.1} parent=1 // pred_region
      %s434 = ssub.s32 128, 128
      %435 = vsyncadd [#allocation3], %s434
      %s437 = sshll.u32 [#allocation2], 4
      %s438 = int_to_ptr.vmem [resolvable:$true] %s437
      %440 = dma.vmem_to_hbm [thread:$0]  %s438, 128, %s9, [#allocation3]
    $region41: #{tpu_custom_call.1} parent=1 // pred_fallthru
      _
    // Predicated region
    $region42: #{tpu_custom_call.1} parent=1 // pred_check
      _
    $region43: #{tpu_custom_call.1} parent=1 // pred_check_branch
      %442 = sbr.rel (0) target = $region45
    $region44: #{tpu_custom_call.1} parent=1 // pred_region
      %443 = dma.done [#allocation3], 128
    $region45: #{tpu_custom_call.1} parent=1 // pred_fallthru
      _
    %444 = vsyncpa [#allocation3], 1

</llo_original>
